<compile_context>
chip_gen: v6e
topology: v6e:2x2x1
jax: 0.10.0
libtpu: 0.0.40
codegen_flags: <defaults>
</compile_context>

<pallas_src>
import jax
import jax.numpy as jnp
from jax.experimental import pallas as pl
from jax.experimental.pallas import tpu as pltpu

LANE = 128


def _round_up(n, m):
    return ((n + m - 1) // m) * m


def prepare_toy_rnn_params(weight_ih, weight_hh, bias_ih, bias_hh):
    """One-time parameter preparation (do this OUTSIDE any time/scan loop).

    weight_ih: [d_model, inpt_size]  (PyTorch layout)
    weight_hh: [d_model, d_model]    (PyTorch layout)
    bias_ih, bias_hh: [1] scalars

    Returns:
      w_fused: [inpt_size + d_model, d_pad]  == [W_ih^T ; W_hh^T], output dim
               zero-padded to a multiple of 128 lanes (lane-dense stores).
      bias:    [1] f32, bias_ih + bias_hh pre-summed.
      d_pad:   padded output feature count (multiple of 128).
    """
    d_model = weight_ih.shape[0]
    d_pad = _round_up(d_model, LANE)
    w_stack = jnp.concatenate(
        [jnp.asarray(weight_ih).T, jnp.asarray(weight_hh).T], axis=0
    )  # [inpt_size + d_model, d_model]
    w_fused = jnp.pad(w_stack, ((0, 0), (0, d_pad - d_model)))
    bias = (jnp.asarray(bias_ih) + jnp.asarray(bias_hh)).reshape(1).astype(jnp.float32)
    return w_fused, bias, d_pad


def toy_rnn_cell_kernel(xh_ref, w_ref, bias_ref, o_ref):
    # Single MXU pass: [B, K] @ [K, d_pad] with f32 accumulation.
    acc = jnp.dot(xh_ref[...], w_ref[...], preferred_element_type=jnp.float32)
    # One pre-summed scalar bias from SMEM.
    acc = acc + bias_ref[0]
    o_ref[...] = acc.astype(o_ref.dtype)


def _toy_rnn_cell_fused(xh, w_fused, bias):
    B, K = xh.shape
    d_pad = w_fused.shape[1]
    flops = 2 * B * K * d_pad
    bytes_accessed = (
        xh.size * xh.dtype.itemsize
        + w_fused.size * w_fused.dtype.itemsize
        + bias.size * bias.dtype.itemsize
        + B * d_pad * xh.dtype.itemsize
    )
    return pl.pallas_call(
        toy_rnn_cell_kernel,
        out_shape=jax.ShapeDtypeStruct((B, d_pad), xh.dtype),
        in_specs=[
            pl.BlockSpec(memory_space=pltpu.VMEM),   # [x | h] fused activations
            pl.BlockSpec(memory_space=pltpu.VMEM),   # fused, lane-padded weight
            pl.BlockSpec(memory_space=pltpu.SMEM),   # pre-summed scalar bias
        ],
        out_specs=pl.BlockSpec(memory_space=pltpu.VMEM),
        cost_estimate=pl.CostEstimate(
            flops=flops, transcendentals=0, bytes_accessed=bytes_accessed
        ),
    )(xh, w_fused, bias)


def toy_rnn_cell(x, h, w_fused, bias, d_model):
    """x: [B, inpt_size], h: [B, d_model], w_fused/bias from
    prepare_toy_rnn_params(); returns [B, d_model]."""
    xh = jnp.concatenate([x, h], axis=-1)          # [B, inpt_size + d_model]
    out_pad = _toy_rnn_cell_fused(xh, w_fused, bias)
    return out_pad[:, :d_model]


if __name__ == "__main__":
    # Small shapes consistent with the module: batch=8, inpt_size=32, d_model=32
    batch, inpt_size, d_model = 8, 32, 32

    key = jax.random.PRNGKey(0)
    kx, kh = jax.random.split(key)
    x = jax.random.normal(kx, (batch, inpt_size), dtype=jnp.float32)
    h = jax.random.normal(kh, (batch, d_model), dtype=jnp.float32)

    # Deterministic parameter init mirroring ToyRNNCell.reset_parameters()
    weight_ih = jnp.eye(inpt_size, dtype=jnp.float32)[:d_model]  # [d_model, inpt_size]
    weight_hh = jnp.eye(d_model, dtype=jnp.float32)              # [d_model, d_model]
    bias_ih = jnp.zeros((1,), dtype=jnp.float32)
    bias_hh = jnp.zeros((1,), dtype=jnp.float32)

    # One-time parameter prep (outside any time loop).
    w_fused, bias, _ = prepare_toy_rnn_params(weight_ih, weight_hh, bias_ih, bias_hh)

    out = toy_rnn_cell(x, h, w_fused, bias, d_model)
    out = jax.block_until_ready(out)

    # Pure-JAX reference check against the original (unfused) semantics.
    ref = x @ weight_ih.T + h @ weight_hh.T + bias_ih + bias_hh
    assert out.shape == (batch, d_model)
    assert jnp.allclose(out, ref, atol=1e-5, rtol=1e-5)

    print("KERNEL_OK")
</pallas_src>

<mosaic_0001>
module attributes {stable_mosaic.version = 11 : i64} {
  func.func @toy_rnn_cell_kernel(%arg0: memref<8x64xf32, #tpu.memory_space<vmem>>, %arg1: memref<64x128xf32, #tpu.memory_space<vmem>>, %arg2: memref<1xf32, #tpu.memory_space<smem>>, %arg3: memref<8x128xf32, #tpu.memory_space<vmem>>) attributes {dimension_semantics = [], scalar_prefetch = 0 : i64, scratch_operands = 0 : i64, tpu.core_type = #tpu.core_type<tc>} {
    %c0 = arith.constant 0 : index
    %c0_0 = arith.constant 0 : index
    %0 = vector.load %arg0[%c0, %c0_0] : memref<8x64xf32, #tpu.memory_space<vmem>>, vector<8x64xf32>
    %c0_1 = arith.constant 0 : index
    %c0_2 = arith.constant 0 : index
    %1 = vector.load %arg1[%c0_1, %c0_2] : memref<64x128xf32, #tpu.memory_space<vmem>>, vector<64x128xf32>
    %cst = arith.constant dense<0.000000e+00> : vector<8x128xf32>
    %2 = tpu.matmul %0, %1, %cst {dimension_numbers = #tpu.dot_dimension_numbers<[1], [0], [0], [1], [0, 0, 1, 1], [], []>} : vector<8x64xf32>, vector<64x128xf32>, vector<8x128xf32> -> vector<8x128xf32>
    %c0_3 = arith.constant 0 : index
    %3 = memref.load %arg2[%c0_3] : memref<1xf32, #tpu.memory_space<smem>>
    %4 = vector.broadcast %3 : f32 to vector<8x128xf32>
    %5 = arith.addf %2, %4 : vector<8x128xf32>
    %c0_4 = arith.constant 0 : index
    %c0_5 = arith.constant 0 : index
    %6 = vector.load %arg3[%c0_4, %c0_5] : memref<8x128xf32, #tpu.memory_space<vmem>>, vector<8x128xf32>
    tpu.vector_store %arg3[%c0_4, %c0_5], %5 {strides = array<i32>} : memref<8x128xf32, #tpu.memory_space<vmem>>, vector<8x128xf32>,
    return
  }
}

</mosaic_0001>

<llo_original>
// kernel: tpu_custom_call.1
$region0: #{tpu_custom_call.1}
  #allocation0 [shape = 'u32[]', space=smem, size = 0x4, offset = 0x4, fixed_abs, tag = 'smem constant byte address 0x4 - core index']
  #allocation1 [shape = 'u32[144,128]{1,0:T(1,128)}', space=vmem, size = 0x12000, scoped, tag = 'internal scratch']
  #allocation2 [shape = 'f32[1]{0:T(128)S(6)}', space=smem, size = 0x200, scoped, tag = 'scoped memory for tpu_custom_call.1']
  %s0 = inlined_call_operand.hbm [shape: f32[8,64], index: 0, kind: input, shape index: {}]
  %s1 = inlined_call_operand.hbm [shape: f32[64,128], index: 1, kind: input, shape index: {}]
  %s2 = inlined_call_operand.<no memory space> [shape: f32[1], index: 2, kind: input, shape index: {}]
  %s3 = inlined_call_operand.hbm [shape: f32[8,128], index: 3, kind: output, shape index: {}]
  %s4 = sld [smem:[#allocation0]]
  $region30: #{tpu_custom_call.1} parent=0
    _
  %s6 = ssub.s32 1, %s4
  %s7 = scalar_select 0, %s6, %s4
  %8 = sst [smem:[#allocation2]] %s2
  $region1: #{tpu_custom_call.1} parent=0
    #allocation3 [shape = 'u8[4096]{0}', space=vmem, size = 0x1000, scoped, tag = 'input window, operand 0, single buffered']
    #allocation4 [shape = 's32[1]{0}', space=sflag, size = 0x4, scoped, tag = 'scoped memory for tpu_custom_call.1']
    #allocation5 [shape = 's32[1]{0}', space=sflag, size = 0x4, scoped, tag = 'scoped memory for tpu_custom_call.1']
    #allocation6 [shape = 'u8[32768]{0}', space=vmem, size = 0x8000, scoped, tag = 'input window, operand 1, single buffered']
    #allocation7 [shape = 's32[1]{0}', space=sflag, size = 0x4, scoped, tag = 'scoped memory for tpu_custom_call.1']
    #allocation8 [shape = 'u8[4096]{0}', space=vmem, size = 0x1000, scoped, tag = 'output window, operand 0, single buffered']
    %9 = vsyncpa [#allocation4], 0
    %10 = vsyncpa [#allocation7], 0
    %11 = vsyncpa [#allocation5], 0
    // Predicated region
    $region2: #{tpu_custom_call.1} parent=1 // pred_check
      _
    $region3: #{tpu_custom_call.1} parent=1 // pred_check_branch
      %13 = sbr.rel (0) target = $region5
    $region4: #{tpu_custom_call.1} parent=1 // pred_region
      %s15 = ssub.s32 128, 128
      %16 = vsyncadd [#allocation4], %s15
      %s18 = sshll.u32 [#allocation3], 4
      %s19 = int_to_ptr.vmem [resolvable:$true] %s18
      %21 = dma.hbm_to_vmem [thread:$0]  %s0, 128, %s19, [#allocation4]
    $region5: #{tpu_custom_call.1} parent=1 // pred_fallthru
      _
    // Predicated region
    $region6: #{tpu_custom_call.1} parent=1 // pred_check
      _
    $region7: #{tpu_custom_call.1} parent=1 // pred_check_branch
      %23 = sbr.rel (0) target = $region9
    $region8: #{tpu_custom_call.1} parent=1 // pred_region
      %s25 = ssub.s32 1024, 1024
      %26 = vsyncadd [#allocation7], %s25
      %s27 = sshll.u32 [#allocation6], 4
      %s28 = int_to_ptr.vmem [resolvable:$true] %s27
      %33 = dma.hbm_to_vmem [thread:$0]  %s1, 1024, %s28, [#allocation7], 128, 128, 8
    $region9: #{tpu_custom_call.1} parent=1 // pred_fallthru
      _
    // Predicated region
    $region10: #{tpu_custom_call.1} parent=1 // pred_check
      _
    $region11: #{tpu_custom_call.1} parent=1 // pred_check_branch
      %35 = sbr.rel (0) target = $region13
    $region12: #{tpu_custom_call.1} parent=1 // pred_region
      _
    $region13: #{tpu_custom_call.1} parent=1 // pred_fallthru
      _
    // Predicated region
    $region14: #{tpu_custom_call.1} parent=1 // pred_check
      _
    $region15: #{tpu_custom_call.1} parent=1 // pred_check_branch
      %37 = sbr.rel (0) target = $region17
    $region16: #{tpu_custom_call.1} parent=1 // pred_region
      %38 = dma.done [#allocation4], 128
    $region17: #{tpu_custom_call.1} parent=1 // pred_fallthru
      _
    // Predicated region
    $region18: #{tpu_custom_call.1} parent=1 // pred_check
      _
    $region19: #{tpu_custom_call.1} parent=1 // pred_check_branch
      %40 = sbr.rel (0) target = $region21
    $region20: #{tpu_custom_call.1} parent=1 // pred_region
      %41 = dma.done [#allocation7], 1024
    $region21: #{tpu_custom_call.1} parent=1 // pred_fallthru
      _
    %v42 = vld [vmem:[#allocation3] sm:$0xff]
    %v43 = vld [vmem:[#allocation6] sm:$0xff]
    %v44 = vld [vmem:[#allocation6 + $0x8] sm:$0xff]
    %v45 = vld [vmem:[#allocation6 + $0x10] sm:$0xff]
    %v46 = vld [vmem:[#allocation6 + $0x18] sm:$0xff]
    %v47 = vld [vmem:[#allocation6 + $0x20] sm:$0xff]
    %v48 = vld [vmem:[#allocation6 + $0x28] sm:$0xff]
    %v49 = vld [vmem:[#allocation6 + $0x30] sm:$0xff]
    %v50 = vld [vmem:[#allocation6 + $0x38] sm:$0xff]
    %s51 = sld [smem:[#allocation2]]
    %v52 = vstv %s51
    %vm53 = vcmask 523264
    %v55 = vsel %vm53, %v42, 0
    %57 = vmatprep.subr.mxu0 0.0
    %58 = vmatpush1.msra.mxu0 0.0
    %59 = vmatprep.subr.mxu0 0.0
    %60 = vmatpush1.msra.mxu0 0.0
    %61 = vmatprep.subr.mxu0 0.0
    %62 = vmatpush1.msra.mxu0 0.0
    %63 = vmatprep.subr.mxu0 0.0
    %64 = vmatpush1.msra.mxu0 0.0
    %65 = vmatprep.subr.mxu0 0.0
    %66 = vmatpush1.msra.mxu0 0.0
    %67 = vmatprep.subr.mxu0 0.0
    %68 = vmatpush1.msra.mxu0 0.0
    %69 = vmatprep.subr.mxu0 0.0
    %70 = vmatpush1.msra.mxu0 0.0
    %71 = vmatprep.subr.mxu0 0.0
    %72 = vmatpush1.msra.mxu0 0.0
    %73 = vmatprep.subr.mxu0 0.0
    %74 = vmatpush1.msra.mxu0 %v50
    %75 = vmatprep.subr.mxu0 0.0
    %76 = vmatpush1.msra.mxu0 %v49
    %77 = vmatprep.subr.mxu0 0.0
    %78 = vmatpush1.msra.mxu0 %v48
    %79 = vmatprep.subr.mxu0 0.0
    %80 = vmatpush1.msra.mxu0 %v47
    %81 = vmatprep.subr.mxu0 0.0
    %82 = vmatpush1.msra.mxu0 %v46
    %83 = vmatprep.subr.mxu0 0.0
    %84 = vmatpush1.msra.mxu0 %v45
    %85 = vmatprep.subr.mxu0 0.0
    %86 = vmatpush1.msra.mxu0 %v44
    %87 = vmatprep.subr.mxu0 0.0
    %88 = vmatpush1.msra.mxu0 %v43
    %89 = vmatprep.subr.mxu0 0.0
    %90 = vmatpush2.msra.mxu0 0.0
    %91 = vmatprep.subr.mxu0 0.0
    %92 = vmatpush2.msra.mxu0 0.0
    %93 = vmatprep.subr.mxu0 0.0
    %94 = vmatpush2.msra.mxu0 0.0
    %95 = vmatprep.subr.mxu0 0.0
    %96 = vmatpush2.msra.mxu0 0.0
    %97 = vmatprep.subr.mxu0 0.0
    %98 = vmatpush2.msra.mxu0 0.0
    %99 = vmatprep.subr.mxu0 0.0
    %100 = vmatpush2.msra.mxu0 0.0
    %101 = vmatprep.subr.mxu0 0.0
    %102 = vmatpush2.msra.mxu0 0.0
    %103 = vmatprep.subr.mxu0 0.0
    %104 = vmatpush2.msra.mxu0 0.0
    %105 = vmatprep.subr.mxu0 0.0
    %106 = vmatpush2.msra.mxu0 0.0
    %107 = vmatprep.subr.mxu0 0.0
    %108 = vmatpush2.msra.mxu0 0.0
    %109 = vmatprep.subr.mxu0 0.0
    %110 = vmatpush2.msra.mxu0 0.0
    %111 = vmatprep.subr.mxu0 0.0
    %112 = vmatpush2.msra.mxu0 0.0
    %113 = vmatprep.subr.mxu0 0.0
    %114 = vmatpush2.msra.mxu0 0.0
    %115 = vmatprep.subr.mxu0 0.0
    %116 = vmatpush2.msra.mxu0 0.0
    %117 = vmatprep.subr.mxu0 0.0
    %118 = vmatpush2.msra.mxu0 0.0
    %119 = vmatprep.subr.mxu0 0.0
    %120 = vmatpush2.msra.mxu0 0.0
    %121 = vmatprep.mubr.f32.mxu0 0.0
    %122 = vmatmul.mubr.f32.gmra.mxu0 %v55
    %v123 = vpop.f32.mrf.mxu0
    %v124 = vadd.f32 %v52, %v123
    %v125 = vpop.f32.mrf.mxu0
    %126 = vdwg.mxu0
    %127 = vst [vmem:[#allocation8] sm:$0xff] %v124
    // Predicated region
    $region22: #{tpu_custom_call.1} parent=1 // pred_check
      _
    $region23: #{tpu_custom_call.1} parent=1 // pred_check_branch
      %129 = sbr.rel (0) target = $region25
    $region24: #{tpu_custom_call.1} parent=1 // pred_region
      %s131 = ssub.s32 128, 128
      %132 = vsyncadd [#allocation5], %s131
      %s134 = sshll.u32 [#allocation8], 4
      %s135 = int_to_ptr.vmem [resolvable:$true] %s134
      %137 = dma.vmem_to_hbm [thread:$0]  %s135, 128, %s3, [#allocation5]
    $region25: #{tpu_custom_call.1} parent=1 // pred_fallthru
      _
    // Predicated region
    $region26: #{tpu_custom_call.1} parent=1 // pred_check
      _
    $region27: #{tpu_custom_call.1} parent=1 // pred_check_branch
      %139 = sbr.rel (0) target = $region29
    $region28: #{tpu_custom_call.1} parent=1 // pred_region
      %140 = dma.done [#allocation5], 128
    $region29: #{tpu_custom_call.1} parent=1 // pred_fallthru
      _
    %141 = vsyncpa [#allocation4], 1
    %142 = vsyncpa [#allocation7], 1
    %143 = vsyncpa [#allocation5], 1

</llo_original>
